<compile_context>
chip_gen: v6e
topology: v6e:2x2x1
jax: 0.10.0
libtpu: 0.0.40
codegen_flags: <defaults>
</compile_context>

<pallas_src>
import functools
import math

import jax
import jax.numpy as jnp
from jax.experimental import pallas as pl
from jax.experimental.pallas import tpu as pltpu


def _mlp_kernel(x_ref, w1_ref, b1_ref, w2_ref, b2_ref, o_ref):
    # x_ref:  (d_in, tl)   bf16  -- tl (B*N) lanes, lane-dense
    # w1_ref: (H, d_in)    bf16  -- resident (constant block index)
    # b1_ref: (H, 1)       f32
    # w2_ref: (d_out, H)   bf16
    # b2_ref: (d_out, 1)   f32
    # o_ref:  (d_out, tl)  f32   -- lane-dense, unmasked stores
    h = jnp.dot(w1_ref[...], x_ref[...],
                preferred_element_type=jnp.float32)            # (H, tl)
    h = jnp.maximum(h + b1_ref[...], 0.0)                      # f32 bias + ReLU
    y = jnp.dot(w2_ref[...], h.astype(jnp.bfloat16),
                preferred_element_type=jnp.float32)            # (d_out, tl)
    o_ref[...] = (y + b2_ref[...]).astype(o_ref.dtype)


def _round_up(x, m):
    return ((x + m - 1) // m) * m


def _choose_lane_tile(L, *, tl_max=2048, lane_align=256):
    """Pick the lane (B*N) tile and the padded lane extent.

    - tile is a multiple of 256 (v6e/v7x MXU lane-pass width; superset of
      v5e's 128) so every MXU pass and every store is lane-dense.
    - padded extent is a multiple of the tile so no boundary block exists
      (no masked partial stores).
    - prefer >= 2 grid steps when there is enough work, so v7x's two
      TensorCores both get a share of the "parallel" axis.
    """
    Lp = _round_up(max(L, 1), lane_align)
    tl = min(Lp, tl_max)
    if tl == Lp and Lp >= 2 * lane_align:
        tl = _round_up((Lp + 1) // 2, lane_align)   # split roughly in half
    Lp = _round_up(L, tl)                           # all blocks full
    return tl, Lp


def _mlp_lanes(x3, w1, b1, w2, b2, *, tl_max=2048):
    """x3: (d_in, Lp) bf16 -> (d_out, Lp) f32 via Pallas.  Lp % tl == 0."""
    d_in, Lp = x3.shape
    H = w1.shape[0]
    d_out = w2.shape[0]
    tl = min(tl_max, Lp)
    assert Lp % tl == 0
    n_steps = Lp // tl

    flops = 2 * Lp * (d_in * H + H * d_out)
    bytes_accessed = (x3.size * 2 + Lp * d_out * 4
                      + (w1.size + w2.size) * 2 + (b1.size + b2.size) * 4)

    return pl.pallas_call(
        _mlp_kernel,
        out_shape=jax.ShapeDtypeStruct((d_out, Lp), jnp.float32),
        grid_spec=pltpu.PrefetchScalarGridSpec(
            num_scalar_prefetch=0,
            grid=(n_steps,),
            in_specs=[
                pl.BlockSpec((d_in, tl), lambda i: (0, i)),
                pl.BlockSpec((H, d_in), lambda i: (0, 0)),
                pl.BlockSpec((H, 1), lambda i: (0, 0)),
                pl.BlockSpec((d_out, H), lambda i: (0, 0)),
                pl.BlockSpec((d_out, 1), lambda i: (0, 0)),
            ],
            out_specs=pl.BlockSpec((d_out, tl), lambda i: (0, i)),
        ),
        compiler_params=pltpu.CompilerParams(
            dimension_semantics=("parallel",),
        ),
        cost_estimate=pl.CostEstimate(
            flops=flops, transcendentals=0, bytes_accessed=bytes_accessed),
    )(x3, w1, b1, w2, b2)


class MLPPallas:
    """Deterministically-initialized JAX/Pallas replica of models/baseline/MLP.py."""

    def __init__(self, in_steps=12, out_steps=12, input_dim=1, output_dim=1,
                 hidden_dim=256, key=jax.random.PRNGKey(0)):
        self.in_steps = in_steps
        self.out_steps = out_steps
        self.input_dim = input_dim
        self.output_dim = output_dim
        self.hidden_dim = hidden_dim

        d_in = in_steps * input_dim
        d_out = out_steps * output_dim

        k1, k2, k3, k4 = jax.random.split(key, 4)
        # Mimic nn.Linear default init: U(-1/sqrt(fan_in), 1/sqrt(fan_in)).
        # Weights stay in PyTorch (out_features, in_features) layout; the
        # kernel contracts the trailing axis directly (no transpose needed).
        bound1 = 1.0 / math.sqrt(d_in)
        bound2 = 1.0 / math.sqrt(hidden_dim)
        self.w1 = jax.random.uniform(k1, (hidden_dim, d_in), jnp.float32,
                                     -bound1, bound1).astype(jnp.bfloat16)
        self.b1 = jax.random.uniform(k2, (hidden_dim, 1), jnp.float32,
                                     -bound1, bound1)
        self.w2 = jax.random.uniform(k3, (d_out, hidden_dim), jnp.float32,
                                     -bound2, bound2).astype(jnp.bfloat16)
        self.b2 = jax.random.uniform(k4, (d_out, 1), jnp.float32,
                                     -bound2, bound2)

    @functools.partial(jax.jit, static_argnums=0)
    def __call__(self, x):
        # x: (B, in_steps, num_nodes, input_dim)
        B, T, N, C = x.shape
        d_in = self.in_steps * self.input_dim

        # (B,T,N,C) -> (T,C,B,N) -> (d_in, B*N): features (t,c)-flattened on
        # sublanes, all (batch, node) columns merged onto the lane axis.
        # Pre-cast to bf16 (halves the staging-copy HBM traffic; v5e has no
        # bf16 VALU so casting here instead of in-kernel is also cheaper).
        L = B * N
        x3 = jnp.transpose(x.astype(jnp.bfloat16), (1, 3, 0, 2)).reshape(d_in, L)

        tl, Lp = _choose_lane_tile(L)
        if Lp != L:
            # Padded lane columns are inert: node columns are independent and
            # they are sliced off below.
            x3 = jnp.pad(x3, ((0, 0), (0, Lp - L)))

        y3 = _mlp_lanes(x3, self.w1, self.b1, self.w2, self.b2, tl_max=tl)

        # (d_out, B*N) -> (out_steps, output_dim, B, N) -> (B, out_steps, N, output_dim)
        y = y3[:, :L].reshape(self.out_steps, self.output_dim, B, N)
        return jnp.transpose(y, (2, 0, 3, 1))


if __name__ == "__main__":
    # Small, forward-consistent shapes: batch=2, in_steps=12, nodes=16, input_dim=1.
    B, T_IN, N, C = 2, 12, 16, 1
    model = MLPPallas(in_steps=T_IN, out_steps=12, input_dim=C, output_dim=1,
                      hidden_dim=256, key=jax.random.PRNGKey(0))

    x = jax.random.normal(jax.random.PRNGKey(0), (B, T_IN, N, C), jnp.float32)

    out = jax.block_until_ready(model(x))
    assert out.shape == (B, 12, N, 1), out.shape

    # Pure-JAX reference of the same math (reproducing the kernel's bf16
    # rounding of layer-1 inputs, both weight matrices and the hidden
    # activation fed to layer 2; accumulation stays in f32).
    x2d = jnp.transpose(x, (0, 2, 1, 3)).reshape(B * N, T_IN * C)
    xr = x2d.astype(jnp.bfloat16).astype(jnp.float32)
    w1f = model.w1.astype(jnp.float32)
    h = jnp.maximum(xr @ w1f.T + model.b1[:, 0][None, :], 0.0)
    hr = h.astype(jnp.bfloat16).astype(jnp.float32)
    w2f = model.w2.astype(jnp.float32)
    ref2d = hr @ w2f.T + model.b2[:, 0][None, :]
    ref = jnp.transpose(ref2d.reshape(B, N, 12, 1), (0, 2, 1, 3))
    assert jnp.allclose(out, ref, atol=2e-3, rtol=2e-3), \
        float(jnp.max(jnp.abs(out - ref)))

    print("KERNEL_OK")
</pallas_src>

<mosaic_0001>
module attributes {stable_mosaic.version = 11 : i64} {
  func.func @_mlp_kernel(%arg0: i32, %arg1: memref<12x256xbf16, #tpu.memory_space<vmem>>, %arg2: memref<256x12xbf16, #tpu.memory_space<vmem>>, %arg3: memref<256x1xf32, #tpu.memory_space<vmem>>, %arg4: memref<12x256xbf16, #tpu.memory_space<vmem>>, %arg5: memref<12x1xf32, #tpu.memory_space<vmem>>, %arg6: memref<12x256xf32, #tpu.memory_space<vmem>>) attributes {dimension_semantics = [#tpu.dimension_semantics<parallel>], iteration_bounds = array<i64: 1>, scalar_prefetch = 0 : i64, scratch_operands = 0 : i64, tpu.core_type = #tpu.core_type<tc>, window_params = [{transform_indices = @transform_0, window_bounds = array<i64: 12, 256>}, {pipeline_mode = #tpu.pipeline_mode<synchronous>, transform_indices = @transform_1, window_bounds = array<i64: 256, 12>}, {pipeline_mode = #tpu.pipeline_mode<synchronous>, transform_indices = @transform_2, window_bounds = array<i64: 256, 1>}, {pipeline_mode = #tpu.pipeline_mode<synchronous>, transform_indices = @transform_3, window_bounds = array<i64: 12, 256>}, {pipeline_mode = #tpu.pipeline_mode<synchronous>, transform_indices = @transform_4, window_bounds = array<i64: 12, 1>}, {transform_indices = @transform_5, window_bounds = array<i64: 12, 256>}]} {
    %c0 = arith.constant 0 : index
    %c0_0 = arith.constant 0 : index
    %0 = vector.load %arg2[%c0, %c0_0] : memref<256x12xbf16, #tpu.memory_space<vmem>>, vector<256x12xbf16>
    %c0_1 = arith.constant 0 : index
    %c0_2 = arith.constant 0 : index
    %1 = vector.load %arg1[%c0_1, %c0_2] : memref<12x256xbf16, #tpu.memory_space<vmem>>, vector<12x256xbf16>
    %cst = arith.constant dense<0.000000e+00> : vector<256x256xf32>
    %2 = tpu.matmul %0, %1, %cst {dimension_numbers = #tpu.dot_dimension_numbers<[1], [0], [0], [1], [0, 0, 1, 1], [], []>} : vector<256x12xbf16>, vector<12x256xbf16>, vector<256x256xf32> -> vector<256x256xf32>
    %c0_3 = arith.constant 0 : index
    %c0_4 = arith.constant 0 : index
    %3 = vector.load %arg3[%c0_3, %c0_4] : memref<256x1xf32, #tpu.memory_space<vmem>>, vector<256x1xf32>
    %4 = vector.broadcast %3 : vector<256x1xf32> to vector<256x256xf32>
    %5 = arith.addf %2, %4 : vector<256x256xf32>
    %cst_5 = arith.constant 0.000000e+00 : f32
    %6 = vector.broadcast %cst_5 : f32 to vector<256x256xf32>
    %7 = arith.maximumf %5, %6 : vector<256x256xf32>
    %c0_6 = arith.constant 0 : index
    %c0_7 = arith.constant 0 : index
    %8 = vector.load %arg4[%c0_6, %c0_7] : memref<12x256xbf16, #tpu.memory_space<vmem>>, vector<12x256xbf16>
    %9 = arith.truncf %7 : vector<256x256xf32> to vector<256x256xbf16>
    %cst_8 = arith.constant dense<0.000000e+00> : vector<12x256xf32>
    %10 = tpu.matmul %8, %9, %cst_8 {dimension_numbers = #tpu.dot_dimension_numbers<[1], [0], [0], [1], [0, 0, 1, 1], [], []>} : vector<12x256xbf16>, vector<256x256xbf16>, vector<12x256xf32> -> vector<12x256xf32>
    %c0_9 = arith.constant 0 : index
    %c0_10 = arith.constant 0 : index
    %11 = vector.load %arg5[%c0_9, %c0_10] : memref<12x1xf32, #tpu.memory_space<vmem>>, vector<12x1xf32>
    %12 = vector.broadcast %11 : vector<12x1xf32> to vector<12x256xf32>
    %13 = arith.addf %10, %12 : vector<12x256xf32>
    %c0_11 = arith.constant 0 : index
    %c0_12 = arith.constant 0 : index
    %14 = vector.load %arg6[%c0_11, %c0_12] : memref<12x256xf32, #tpu.memory_space<vmem>>, vector<12x256xf32>
    tpu.vector_store %arg6[%c0_11, %c0_12], %13 {strides = array<i32>} : memref<12x256xf32, #tpu.memory_space<vmem>>, vector<12x256xf32>,
    return
  }
  func.func @transform_0(%arg0: i32) -> (i32, i32) {
    %c0_i32 = arith.constant 0 : i32
    %c0_i32_0 = arith.constant 0 : i32
    return %c0_i32, %arg0 : i32, i32
  }
  func.func @transform_1(%arg0: i32) -> (i32, i32) {
    %c0_i32 = arith.constant 0 : i32
    %c0_i32_0 = arith.constant 0 : i32
    %c0_i32_1 = arith.constant 0 : i32
    return %c0_i32, %c0_i32_0 : i32, i32
  }
  func.func @transform_2(%arg0: i32) -> (i32, i32) {
    %c0_i32 = arith.constant 0 : i32
    %c0_i32_0 = arith.constant 0 : i32
    %c0_i32_1 = arith.constant 0 : i32
    return %c0_i32, %c0_i32_0 : i32, i32
  }
  func.func @transform_3(%arg0: i32) -> (i32, i32) {
    %c0_i32 = arith.constant 0 : i32
    %c0_i32_0 = arith.constant 0 : i32
    %c0_i32_1 = arith.constant 0 : i32
    return %c0_i32, %c0_i32_0 : i32, i32
  }
  func.func @transform_4(%arg0: i32) -> (i32, i32) {
    %c0_i32 = arith.constant 0 : i32
    %c0_i32_0 = arith.constant 0 : i32
    %c0_i32_1 = arith.constant 0 : i32
    return %c0_i32, %c0_i32_0 : i32, i32
  }
  func.func @transform_5(%arg0: i32) -> (i32, i32) {
    %c0_i32 = arith.constant 0 : i32
    %c0_i32_0 = arith.constant 0 : i32
    return %c0_i32, %arg0 : i32, i32
  }
}

</mosaic_0001>

<llo_original>
// kernel: a_call__.1
$region0: #{a_call__.1}
  #allocation0 [shape = 'u32[]', space=smem, size = 0x4, offset = 0x4, fixed_abs, tag = 'smem constant byte address 0x4 - core index']
  #allocation1 [shape = 'u32[144,128]{1,0:T(1,128)}', space=vmem, size = 0x12000, scoped, tag = 'internal scratch']
  %s0 = inlined_call_operand.vmem [shape: bf16[12,256], index: 0, kind: input, shape index: {}]
  %s1 = inlined_call_operand.vmem [shape: bf16[256,12], index: 1, kind: input, shape index: {}]
  %s2 = inlined_call_operand.hbm [shape: f32[256,1], index: 2, kind: input, shape index: {}]
  %s3 = inlined_call_operand.hbm [shape: bf16[12,256], index: 3, kind: input, shape index: {}]
  %s4 = inlined_call_operand.hbm [shape: f32[12,1], index: 4, kind: input, shape index: {}]
  %s5 = inlined_call_operand.vmem [shape: f32[12,256], index: 5, kind: output, shape index: {}]
  %s6 = sld [smem:[#allocation0]]
  $region42: #{a_call__.1} parent=0
    _
  %s8 = ssub.s32 1, %s6
  %s9 = scalar_select 0, %s8, %s6
  $region1: #{a_call__.1} parent=0
    #allocation2 [shape = 'u8[131072]{0}', space=vmem, size = 0x20000, scoped, tag = 'input window, operand 2, single buffered']
    #allocation3 [shape = 's32[1]{0}', space=sflag, size = 0x4, scoped, tag = 'scoped memory for a_call__.1']
    #allocation4 [shape = 'u8[8192]{0}', space=vmem, size = 0x2000, scoped, tag = 'input window, operand 3, single buffered']
    #allocation5 [shape = 's32[1]{0}', space=sflag, size = 0x4, scoped, tag = 'scoped memory for a_call__.1']
    #allocation6 [shape = 'u8[8192]{0}', space=vmem, size = 0x2000, scoped, tag = 'input window, operand 4, single buffered']
    %10 = vsyncpa [#allocation3], 0
    %11 = vsyncpa [#allocation5], 0
    // Predicated region
    $region2: #{a_call__.1} parent=1 // pred_check
      _
    $region3: #{a_call__.1} parent=1 // pred_check_branch
      %13 = sbr.rel (0) target = $region5
    $region4: #{a_call__.1} parent=1 // pred_region
      _
    $region5: #{a_call__.1} parent=1 // pred_fallthru
      _
    // Predicated region
    $region6: #{a_call__.1} parent=1 // pred_check
      _
    $region7: #{a_call__.1} parent=1 // pred_check_branch
      %15 = sbr.rel (0) target = $region9
    $region8: #{a_call__.1} parent=1 // pred_region
      _
    $region9: #{a_call__.1} parent=1 // pred_fallthru
      _
    // Predicated region
    $region10: #{a_call__.1} parent=1 // pred_check
      _
    $region11: #{a_call__.1} parent=1 // pred_check_branch
      %17 = sbr.rel (0) target = $region13
    $region12: #{a_call__.1} parent=1 // pred_region
      %s19 = ssub.s32 4096, 4096
      %20 = vsyncadd [#allocation3], %s19
      %s21 = sshll.u32 [#allocation2], 4
      %s22 = int_to_ptr.vmem [resolvable:$true] %s21
      %27 = dma.hbm_to_vmem [thread:$0]  %s2, 4096, %s22, [#allocation3], 128, 128, 8
    $region13: #{a_call__.1} parent=1 // pred_fallthru
      _
    // Predicated region
    $region14: #{a_call__.1} parent=1 // pred_check
      _
    $region15: #{a_call__.1} parent=1 // pred_check_branch
      %29 = sbr.rel (0) target = $region17
    $region16: #{a_call__.1} parent=1 // pred_region
      %s31 = ssub.s32 256, 256
      %32 = vsyncadd [#allocation5], %s31
      %s33 = sshll.u32 [#allocation4], 4
      %s34 = int_to_ptr.vmem [resolvable:$true] %s33
      %39 = dma.hbm_to_vmem [thread:$0]  %s3, 256, %s34, [#allocation5], 128, 128, 8
    $region17: #{a_call__.1} parent=1 // pred_fallthru
      _
    // Predicated region
    $region18: #{a_call__.1} parent=1 // pred_check
      _
    $region19: #{a_call__.1} parent=1 // pred_check_branch
      %41 = sbr.rel (0) target = $region21
    $region20: #{a_call__.1} parent=1 // pred_region
      %s43 = ssub.s32 256, 256
      %44 = vsyncadd [#allocation5], %s43
      %s45 = sshll.u32 [#allocation6], 4
      %s46 = int_to_ptr.vmem [resolvable:$true] %s45
      %51 = dma.hbm_to_vmem [thread:$0]  %s4, 256, %s46, [#allocation5], 128, 128, 8
    $region21: #{a_call__.1} parent=1 // pred_fallthru
      _
    // Predicated region
    $region22: #{a_call__.1} parent=1 // pred_check
      _
    $region23: #{a_call__.1} parent=1 // pred_check_branch
      %53 = sbr.rel (0) target = $region25
    $region24: #{a_call__.1} parent=1 // pred_region
      %54 = dma.done [#allocation3], 4096
    $region25: #{a_call__.1} parent=1 // pred_fallthru
      _
    // Predicated region
    $region26: #{a_call__.1} parent=1 // pred_check
      _
    $region27: #{a_call__.1} parent=1 // pred_check_branch
      %56 = sbr.rel (0) target = $region29
    $region28: #{a_call__.1} parent=1 // pred_region
      %57 = dma.done [#allocation5], 256
    $region29: #{a_call__.1} parent=1 // pred_fallthru
      _
    // Predicated region
    $region30: #{a_call__.1} parent=1 // pred_check
      _
    $region31: #{a_call__.1} parent=1 // pred_check_branch
      %59 = sbr.rel (0) target = $region33
    $region32: #{a_call__.1} parent=1 // pred_region
      %60 = dma.done [#allocation5], 256
    $region33: #{a_call__.1} parent=1 // pred_fallthru
      _
    %v62 = vld [vmem:[%s1] sm:$0xf]
    %v63 = vld [vmem:[%s1 + $0x4] sm:$0xf]
    %v64 = vld [vmem:[%s1 + $0x8] sm:$0xf]
    %v65 = vld [vmem:[%s1 + $0xc] sm:$0xf]
    %v66 = vld [vmem:[%s1 + $0x10] sm:$0xf]
    %v67 = vld [vmem:[%s1 + $0x14] sm:$0xf]
    %v68 = vld [vmem:[%s1 + $0x18] sm:$0xf]
    %v69 = vld [vmem:[%s1 + $0x1c] sm:$0xf]
    %v70 = vld [vmem:[%s1 + $0x20] sm:$0xf]
    %v71 = vld [vmem:[%s1 + $0x24] sm:$0xf]
    %v72 = vld [vmem:[%s1 + $0x28] sm:$0xf]
    %v73 = vld [vmem:[%s1 + $0x2c] sm:$0xf]
    %v74 = vld [vmem:[%s1 + $0x30] sm:$0xf]
    %v75 = vld [vmem:[%s1 + $0x34] sm:$0xf]
    %v76 = vld [vmem:[%s1 + $0x38] sm:$0xf]
    %v77 = vld [vmem:[%s1 + $0x3c] sm:$0xf]
    %v78 = vld [vmem:[%s1 + $0x40] sm:$0xf]
    %v79 = vld [vmem:[%s1 + $0x44] sm:$0xf]
    %v80 = vld [vmem:[%s1 + $0x48] sm:$0xf]
    %v81 = vld [vmem:[%s1 + $0x4c] sm:$0xf]
    %v82 = vld [vmem:[%s1 + $0x50] sm:$0xf]
    %v83 = vld [vmem:[%s1 + $0x54] sm:$0xf]
    %v84 = vld [vmem:[%s1 + $0x58] sm:$0xf]
    %v85 = vld [vmem:[%s1 + $0x5c] sm:$0xf]
    %v86 = vld [vmem:[%s1 + $0x60] sm:$0xf]
    %v87 = vld [vmem:[%s1 + $0x64] sm:$0xf]
    %v88 = vld [vmem:[%s1 + $0x68] sm:$0xf]
    %v89 = vld [vmem:[%s1 + $0x6c] sm:$0xf]
    %v90 = vld [vmem:[%s1 + $0x70] sm:$0xf]
    %v91 = vld [vmem:[%s1 + $0x74] sm:$0xf]
    %v92 = vld [vmem:[%s1 + $0x78] sm:$0xf]
    %v93 = vld [vmem:[%s1 + $0x7c] sm:$0xf]
    %v94 = vld [vmem:[%s0] sm:$0xff]
    %v95 = vld [vmem:[%s0 + $0x8] sm:$0x33]
    %v96 = vld [vmem:[#allocation2] sm:$0xff]
    %v97 = vld [vmem:[#allocation2 + $0x8] sm:$0xff]
    %v98 = vld [vmem:[#allocation2 + $0x10] sm:$0xff]
    %v99 = vld [vmem:[#allocation2 + $0x18] sm:$0xff]
    %v100 = vld [vmem:[#allocation2 + $0x20] sm:$0xff]
    %v101 = vld [vmem:[#allocation2 + $0x28] sm:$0xff]
    %v102 = vld [vmem:[#allocation2 + $0x30] sm:$0xff]
    %v103 = vld [vmem:[#allocation2 + $0x38] sm:$0xff]
    %v104 = vld [vmem:[#allocation2 + $0x40] sm:$0xff]
    %v105 = vld [vmem:[#allocation2 + $0x48] sm:$0xff]
    %v106 = vld [vmem:[#allocation2 + $0x50] sm:$0xff]
    %v107 = vld [vmem:[#allocation2 + $0x58] sm:$0xff]
    %v108 = vld [vmem:[#allocation2 + $0x60] sm:$0xff]
    %v109 = vld [vmem:[#allocation2 + $0x68] sm:$0xff]
    %v110 = vld [vmem:[#allocation2 + $0x70] sm:$0xff]
    %v111 = vld [vmem:[#allocation2 + $0x78] sm:$0xff]
    %v112 = vld [vmem:[#allocation2 + $0x80] sm:$0xff]
    %v113 = vld [vmem:[#allocation2 + $0x88] sm:$0xff]
    %v114 = vld [vmem:[#allocation2 + $0x90] sm:$0xff]
    %v115 = vld [vmem:[#allocation2 + $0x98] sm:$0xff]
    %v116 = vld [vmem:[#allocation2 + $0xa0] sm:$0xff]
    %v117 = vld [vmem:[#allocation2 + $0xa8] sm:$0xff]
    %v118 = vld [vmem:[#allocation2 + $0xb0] sm:$0xff]
    %v119 = vld [vmem:[#allocation2 + $0xb8] sm:$0xff]
    %v120 = vld [vmem:[#allocation2 + $0xc0] sm:$0xff]
    %v121 = vld [vmem:[#allocation2 + $0xc8] sm:$0xff]
    %v122 = vld [vmem:[#allocation2 + $0xd0] sm:$0xff]
    %v123 = vld [vmem:[#allocation2 + $0xd8] sm:$0xff]
    %v124 = vld [vmem:[#allocation2 + $0xe0] sm:$0xff]
    %v125 = vld [vmem:[#allocation2 + $0xe8] sm:$0xff]
    %v126 = vld [vmem:[#allocation2 + $0xf0] sm:$0xff]
    %v127 = vld [vmem:[#allocation2 + $0xf8] sm:$0xff]
    %129 = vset.pattern.permute.xlu0 0
    %130 = vperm.xlu0 %129, %v96
    %v131 = vpop.permute.xlu0 %130
    %134 = vset.pattern.permute.xlu0 0
    %135 = vperm.xlu0 %134, %v97
    %v136 = vpop.permute.xlu0 %135
    %139 = vset.pattern.permute.xlu0 0
    %140 = vperm.xlu0 %139, %v98
    %v141 = vpop.permute.xlu0 %140
    %144 = vset.pattern.permute.xlu0 0
    %145 = vperm.xlu0 %144, %v99
    %v146 = vpop.permute.xlu0 %145
    %149 = vset.pattern.permute.xlu0 0
    %150 = vperm.xlu0 %149, %v100
    %v151 = vpop.permute.xlu0 %150
    %154 = vset.pattern.permute.xlu0 0
    %155 = vperm.xlu0 %154, %v101
    %v156 = vpop.permute.xlu0 %155
    %159 = vset.pattern.permute.xlu0 0
    %160 = vperm.xlu0 %159, %v102
    %v161 = vpop.permute.xlu0 %160
    %164 = vset.pattern.permute.xlu0 0
    %165 = vperm.xlu0 %164, %v103
    %v166 = vpop.permute.xlu0 %165
    %169 = vset.pattern.permute.xlu0 0
    %170 = vperm.xlu0 %169, %v104
    %v171 = vpop.permute.xlu0 %170
    %174 = vset.pattern.permute.xlu0 0
    %175 = vperm.xlu0 %174, %v105
    %v176 = vpop.permute.xlu0 %175
    %179 = vset.pattern.permute.xlu0 0
    %180 = vperm.xlu0 %179, %v106
    %v181 = vpop.permute.xlu0 %180
    %184 = vset.pattern.permute.xlu0 0
    %185 = vperm.xlu0 %184, %v107
    %v186 = vpop.permute.xlu0 %185
    %189 = vset.pattern.permute.xlu0 0
    %190 = vperm.xlu0 %189, %v108
    %v191 = vpop.permute.xlu0 %190
    %194 = vset.pattern.permute.xlu0 0
    %195 = vperm.xlu0 %194, %v109
    %v196 = vpop.permute.xlu0 %195
    %199 = vset.pattern.permute.xlu0 0
    %200 = vperm.xlu0 %199, %v110
    %v201 = vpop.permute.xlu0 %200
    %204 = vset.pattern.permute.xlu0 0
    %205 = vperm.xlu0 %204, %v111
    %v206 = vpop.permute.xlu0 %205
    %209 = vset.pattern.permute.xlu0 0
    %210 = vperm.xlu0 %209, %v112
    %v211 = vpop.permute.xlu0 %210
    %214 = vset.pattern.permute.xlu0 0
    %215 = vperm.xlu0 %214, %v113
    %v216 = vpop.permute.xlu0 %215
    %219 = vset.pattern.permute.xlu0 0
    %220 = vperm.xlu0 %219, %v114
    %v221 = vpop.permute.xlu0 %220
    %224 = vset.pattern.permute.xlu0 0
    %225 = vperm.xlu0 %224, %v115
    %v226 = vpop.permute.xlu0 %225
    %229 = vset.pattern.permute.xlu0 0
    %230 = vperm.xlu0 %229, %v116
    %v231 = vpop.permute.xlu0 %230
    %234 = vset.pattern.permute.xlu0 0
    %235 = vperm.xlu0 %234, %v117
    %v236 = vpop.permute.xlu0 %235
    %239 = vset.pattern.permute.xlu0 0
    %240 = vperm.xlu0 %239, %v118
    %v241 = vpop.permute.xlu0 %240
    %244 = vset.pattern.permute.xlu0 0
    %245 = vperm.xlu0 %244, %v119
    %v246 = vpop.permute.xlu0 %245
    %249 = vset.pattern.permute.xlu0 0
    %250 = vperm.xlu0 %249, %v120
    %v251 = vpop.permute.xlu0 %250
    %254 = vset.pattern.permute.xlu0 0
    %255 = vperm.xlu0 %254, %v121
    %v256 = vpop.permute.xlu0 %255
    %259 = vset.pattern.permute.xlu0 0
    %260 = vperm.xlu0 %259, %v122
    %v261 = vpop.permute.xlu0 %260
    %264 = vset.pattern.permute.xlu0 0
    %265 = vperm.xlu0 %264, %v123
    %v266 = vpop.permute.xlu0 %265
    %269 = vset.pattern.permute.xlu0 0
    %270 = vperm.xlu0 %269, %v124
    %v271 = vpop.permute.xlu0 %270
    %274 = vset.pattern.permute.xlu0 0
    %275 = vperm.xlu0 %274, %v125
    %v276 = vpop.permute.xlu0 %275
    %279 = vset.pattern.permute.xlu0 0
    %280 = vperm.xlu0 %279, %v126
    %v281 = vpop.permute.xlu0 %280
    %284 = vset.pattern.permute.xlu0 0
    %285 = vperm.xlu0 %284, %v127
    %v286 = vpop.permute.xlu0 %285
    %v320 = vunpack.c.l.b16 %v62
    %v321 = vunpack.c.l.b16 %v63
    %v322 = vunpack.c.l.b16 %v64
    %v323 = vunpack.c.l.b16 %v65
    %v324 = vunpack.c.l.b16 %v66
    %v325 = vunpack.c.l.b16 %v67
    %v326 = vunpack.c.l.b16 %v68
    %v327 = vunpack.c.l.b16 %v69
    %v328 = vunpack.c.l.b16 %v70
    %v329 = vunpack.c.l.b16 %v71
    %v330 = vunpack.c.l.b16 %v72
    %v331 = vunpack.c.l.b16 %v73
    %v332 = vunpack.c.l.b16 %v74
    %v333 = vunpack.c.l.b16 %v75
    %v334 = vunpack.c.l.b16 %v76
    %v335 = vunpack.c.l.b16 %v77
    %v336 = vunpack.c.l.b16 %v78
    %v337 = vunpack.c.l.b16 %v79
    %v338 = vunpack.c.l.b16 %v80
    %v339 = vunpack.c.l.b16 %v81
    %v340 = vunpack.c.l.b16 %v82
    %v341 = vunpack.c.l.b16 %v83
    %v342 = vunpack.c.l.b16 %v84
    %v343 = vunpack.c.l.b16 %v85
    %v344 = vunpack.c.l.b16 %v86
    %v345 = vunpack.c.l.b16 %v87
    %v346 = vunpack.c.l.b16 %v88
    %v347 = vunpack.c.l.b16 %v89
    %v348 = vunpack.c.l.b16 %v90
    %v349 = vunpack.c.l.b16 %v91
    %v350 = vunpack.c.l.b16 %v92
    %v351 = vunpack.c.l.b16 %v93
    %v352 = vpack.c.b16 %v321, %v320
    %v353 = vpack.c.b16 %v323, %v322
    %v354 = vpack.c.b16 %v325, %v324
    %v355 = vpack.c.b16 %v327, %v326
    %v356 = vpack.c.b16 %v329, %v328
    %v357 = vpack.c.b16 %v331, %v330
    %v358 = vpack.c.b16 %v333, %v332
    %v359 = vpack.c.b16 %v335, %v334
    %v360 = vpack.c.b16 %v337, %v336
    %v361 = vpack.c.b16 %v339, %v338
    %v362 = vpack.c.b16 %v341, %v340
    %v363 = vpack.c.b16 %v343, %v342
    %v364 = vpack.c.b16 %v345, %v344
    %v365 = vpack.c.b16 %v347, %v346
    %v366 = vpack.c.b16 %v349, %v348
    %v367 = vpack.c.b16 %v351, %v350
    %v370 = vunpack.c.l.b16 %v94
    %v371 = vunpack.c.h.b16 %v94
    %v372 = vunpack.c.l.b16 %v95
    %v373 = vunpack.c.h.b16 %v95
    %v374 = vpack.c.b16 %v372, %v370
    %v375 = vpack.c.b16 %v373, %v371
    %vm376 = vcmask 97280
    %v378 = vsel %vm376, %v352, 0
    %v381 = vsel %vm376, %v353, 0
    %v384 = vsel %vm376, %v354, 0
    %v387 = vsel %vm376, %v355, 0
    %v390 = vsel %vm376, %v356, 0
    %v393 = vsel %vm376, %v357, 0
    %v396 = vsel %vm376, %v358, 0
    %v399 = vsel %vm376, %v359, 0
    %v402 = vsel %vm376, %v360, 0
    %v405 = vsel %vm376, %v361, 0
    %v408 = vsel %vm376, %v362, 0
    %v411 = vsel %vm376, %v363, 0
    %v414 = vsel %vm376, %v364, 0
    %v417 = vsel %vm376, %v365, 0
    %v420 = vsel %vm376, %v366, 0
    %v423 = vsel %vm376, %v367, 0
    %vm425 = vcmask 1045504
    %v427 = vsel %vm425, %v374, 0
    %v430 = vsel %vm425, %v375, 0
    %432 = vmatprep.subr.bf16.mxu0 0
    %433 = vmatpush1.bf16.msra.mxu0 0
    %434 = vmatprep.subr.bf16.mxu0 0
    %435 = vmatpush1.bf16.msra.mxu0 0
    %436 = vmatprep.subr.bf16.mxu0 0
    %437 = vmatpush1.bf16.msra.mxu0 0
    %438 = vmatprep.subr.bf16.mxu0 0
    %439 = vmatpush1.bf16.msra.mxu0 0
    %440 = vmatprep.subr.bf16.mxu0 0
    %441 = vmatpush1.bf16.msra.mxu0 0
    %442 = vmatprep.subr.bf16.mxu0 0
    %443 = vmatpush1.bf16.msra.mxu0 0
    %444 = vmatprep.subr.bf16.mxu0 0
    %445 = vmatpush1.bf16.msra.mxu0 0
    %446 = vmatprep.subr.bf16.mxu0 %v430
    %447 = vmatpush1.bf16.msra.mxu0 %v427
    %448 = vmatprep.subr.bf16.mxu0 0
    %449 = vmatpush2.bf16.msra.mxu0 0
    %450 = vmatprep.subr.bf16.mxu0 0
    %451 = vmatpush2.bf16.msra.mxu0 0
    %452 = vmatprep.subr.bf16.mxu0 0
    %453 = vmatpush2.bf16.msra.mxu0 0
    %454 = vmatprep.subr.bf16.mxu0 0
    %455 = vmatpush2.bf16.msra.mxu0 0
    %456 = vmatprep.subr.bf16.mxu0 0
    %457 = vmatpush2.bf16.msra.mxu0 0
    %458 = vmatprep.subr.bf16.mxu0 0
    %459 = vmatpush2.bf16.msra.mxu0 0
    %460 = vmatprep.subr.bf16.mxu0 0
    %461 = vmatpush2.bf16.msra.mxu0 0
    %462 = vmatprep.subr.bf16.mxu0 0
    %463 = vmatpush2.bf16.msra.mxu0 0
    %464 = vmatprep.mubr.bf16.mxu0 0
    %465 = vmatmul.mubr.bf16.gmra.mxu0 %v378
    %v466 = vpop.f32.mrf.mxu0
    %v467 = vadd.f32 %v131, %v466
    %v468 = vpop.f32.mrf.mxu0
    %v469 = vadd.f32 %v131, %v468
    %v470 = vpop.f32.mrf.mxu0
    %v471 = vadd.f32 %v136, %v470
    %v472 = vpop.f32.mrf.mxu0
    %v473 = vadd.f32 %v136, %v472
    %474 = vmatprep.mubr.bf16.mxu0 0
    %475 = vmatmul.mubr.bf16.gmra.mxu0 %v381
    %v476 = vpop.f32.mrf.mxu0
    %v477 = vadd.f32 %v141, %v476
    %v478 = vpop.f32.mrf.mxu0
    %v479 = vadd.f32 %v141, %v478
    %v480 = vpop.f32.mrf.mxu0
    %v481 = vadd.f32 %v146, %v480
    %v482 = vpop.f32.mrf.mxu0
    %v483 = vadd.f32 %v146, %v482
    %484 = vmatprep.mubr.bf16.mxu0 0
    %485 = vmatmul.mubr.bf16.gmra.mxu0 %v384
    %v486 = vpop.f32.mrf.mxu0
    %v487 = vadd.f32 %v151, %v486
    %v488 = vpop.f32.mrf.mxu0
    %v489 = vadd.f32 %v151, %v488
    %v490 = vpop.f32.mrf.mxu0
    %v491 = vadd.f32 %v156, %v490
    %v492 = vpop.f32.mrf.mxu0
    %v493 = vadd.f32 %v156, %v492
    %494 = vmatprep.mubr.bf16.mxu0 0
    %495 = vmatmul.mubr.bf16.gmra.mxu0 %v387
    %v496 = vpop.f32.mrf.mxu0
    %v497 = vadd.f32 %v161, %v496
    %v498 = vpop.f32.mrf.mxu0
    %v499 = vadd.f32 %v161, %v498
    %v500 = vpop.f32.mrf.mxu0
    %v501 = vadd.f32 %v166, %v500
    %v502 = vpop.f32.mrf.mxu0
    %v503 = vadd.f32 %v166, %v502
    %504 = vmatprep.mubr.bf16.mxu0 0
    %505 = vmatmul.mubr.bf16.gmra.mxu0 %v390
    %v506 = vpop.f32.mrf.mxu0
    %v507 = vadd.f32 %v171, %v506
    %v508 = vpop.f32.mrf.mxu0
    %v509 = vadd.f32 %v171, %v508
    %v510 = vpop.f32.mrf.mxu0
    %v511 = vadd.f32 %v176, %v510
    %v512 = vpop.f32.mrf.mxu0
    %v513 = vadd.f32 %v176, %v512
    %514 = vmatprep.mubr.bf16.mxu0 0
    %515 = vmatmul.mubr.bf16.gmra.mxu0 %v393
    %v516 = vpop.f32.mrf.mxu0
    %v517 = vadd.f32 %v181, %v516
    %v518 = vpop.f32.mrf.mxu0
    %v519 = vadd.f32 %v181, %v518
    %v520 = vpop.f32.mrf.mxu0
    %v521 = vadd.f32 %v186, %v520
    %v522 = vpop.f32.mrf.mxu0
    %v523 = vadd.f32 %v186, %v522
    %524 = vmatprep.mubr.bf16.mxu0 0
    %525 = vmatmul.mubr.bf16.gmra.mxu0 %v396
    %v526 = vpop.f32.mrf.mxu0
    %v527 = vadd.f32 %v191, %v526
    %v528 = vpop.f32.mrf.mxu0
    %v529 = vadd.f32 %v191, %v528
    %v530 = vpop.f32.mrf.mxu0
    %v531 = vadd.f32 %v196, %v530
    %v532 = vpop.f32.mrf.mxu0
    %v533 = vadd.f32 %v196, %v532
    %534 = vmatprep.mubr.bf16.mxu0 0
    %535 = vmatmul.mubr.bf16.gmra.mxu0 %v399
    %v536 = vpop.f32.mrf.mxu0
    %v537 = vadd.f32 %v201, %v536
    %v538 = vpop.f32.mrf.mxu0
    %v539 = vadd.f32 %v201, %v538
    %v540 = vpop.f32.mrf.mxu0
    %v541 = vadd.f32 %v206, %v540
    %v542 = vpop.f32.mrf.mxu0
    %v543 = vadd.f32 %v206, %v542
    %544 = vmatprep.mubr.bf16.mxu0 0
    %545 = vmatmul.mubr.bf16.gmra.mxu0 %v402
    %v546 = vpop.f32.mrf.mxu0
    %v547 = vadd.f32 %v211, %v546
    %v548 = vpop.f32.mrf.mxu0
    %v549 = vadd.f32 %v211, %v548
    %v550 = vpop.f32.mrf.mxu0
    %v551 = vadd.f32 %v216, %v550
    %v552 = vpop.f32.mrf.mxu0
    %v553 = vadd.f32 %v216, %v552
    %554 = vmatprep.mubr.bf16.mxu0 0
    %555 = vmatmul.mubr.bf16.gmra.mxu0 %v405
    %v556 = vpop.f32.mrf.mxu0
    %v557 = vadd.f32 %v221, %v556
    %v558 = vpop.f32.mrf.mxu0
    %v559 = vadd.f32 %v221, %v558
    %v560 = vpop.f32.mrf.mxu0
    %v561 = vadd.f32 %v226, %v560
    %v562 = vpop.f32.mrf.mxu0
    %v563 = vadd.f32 %v226, %v562
    %564 = vmatprep.mubr.bf16.mxu0 0
    %565 = vmatmul.mubr.bf16.gmra.mxu0 %v408
    %v566 = vpop.f32.mrf.mxu0
    %v567 = vadd.f32 %v231, %v566
    %v568 = vpop.f32.mrf.mxu0
    %v569 = vadd.f32 %v231, %v568
    %v570 = vpop.f32.mrf.mxu0
    %v571 = vadd.f32 %v236, %v570
    %v572 = vpop.f32.mrf.mxu0
    %v573 = vadd.f32 %v236, %v572
    %574 = vmatprep.mubr.bf16.mxu0 0
    %575 = vmatmul.mubr.bf16.gmra.mxu0 %v411
    %v576 = vpop.f32.mrf.mxu0
    %v577 = vadd.f32 %v241, %v576
    %v578 = vpop.f32.mrf.mxu0
    %v579 = vadd.f32 %v241, %v578
    %v580 = vpop.f32.mrf.mxu0
    %v581 = vadd.f32 %v246, %v580
    %v582 = vpop.f32.mrf.mxu0
    %v583 = vadd.f32 %v246, %v582
    %584 = vmatprep.mubr.bf16.mxu0 0
    %585 = vmatmul.mubr.bf16.gmra.mxu0 %v414
    %v586 = vpop.f32.mrf.mxu0
    %v587 = vadd.f32 %v251, %v586
    %v588 = vpop.f32.mrf.mxu0
    %v589 = vadd.f32 %v251, %v588
    %v590 = vpop.f32.mrf.mxu0
    %v591 = vadd.f32 %v256, %v590
    %v592 = vpop.f32.mrf.mxu0
    %v593 = vadd.f32 %v256, %v592
    %594 = vmatprep.mubr.bf16.mxu0 0
    %595 = vmatmul.mubr.bf16.gmra.mxu0 %v417
    %v596 = vpop.f32.mrf.mxu0
    %v597 = vadd.f32 %v261, %v596
    %v598 = vpop.f32.mrf.mxu0
    %v599 = vadd.f32 %v261, %v598
    %v600 = vpop.f32.mrf.mxu0
    %v601 = vadd.f32 %v266, %v600
    %v602 = vpop.f32.mrf.mxu0
    %v603 = vadd.f32 %v266, %v602
    %604 = vmatprep.mubr.bf16.mxu0 0
    %605 = vmatmul.mubr.bf16.gmra.mxu0 %v420
    %v606 = vpop.f32.mrf.mxu0
    %v607 = vadd.f32 %v271, %v606
    %v608 = vpop.f32.mrf.mxu0
    %v609 = vadd.f32 %v271, %v608
    %v610 = vpop.f32.mrf.mxu0
    %v611 = vadd.f32 %v276, %v610
    %v612 = vpop.f32.mrf.mxu0
    %v613 = vadd.f32 %v276, %v612
    %614 = vmatprep.mubr.bf16.mxu0 0
    %615 = vmatmul.mubr.bf16.gmra.mxu0 %v423
    %v616 = vpop.f32.mrf.mxu0
    %v617 = vadd.f32 %v281, %v616
    %v618 = vpop.f32.mrf.mxu0
    %v619 = vadd.f32 %v281, %v618
    %v620 = vpop.f32.mrf.mxu0
    %v621 = vadd.f32 %v286, %v620
    %v622 = vpop.f32.mrf.mxu0
    %v623 = vadd.f32 %v286, %v622
    %624 = vdwg.mxu0
    %v625 = vmax.f32 %v467, 0.0
    %v626 = vmax.f32 %v469, 0.0
    %v627 = vmax.f32 %v471, 0.0
    %v628 = vmax.f32 %v473, 0.0
    %v629 = vmax.f32 %v477, 0.0
    %v630 = vmax.f32 %v479, 0.0
    %v631 = vmax.f32 %v481, 0.0
    %v632 = vmax.f32 %v483, 0.0
    %v633 = vmax.f32 %v487, 0.0
    %v634 = vmax.f32 %v489, 0.0
    %v635 = vmax.f32 %v491, 0.0
    %v636 = vmax.f32 %v493, 0.0
    %v637 = vmax.f32 %v497, 0.0
    %v638 = vmax.f32 %v499, 0.0
    %v639 = vmax.f32 %v501, 0.0
    %v640 = vmax.f32 %v503, 0.0
    %v641 = vmax.f32 %v507, 0.0
    %v642 = vmax.f32 %v509, 0.0
    %v643 = vmax.f32 %v511, 0.0
    %v644 = vmax.f32 %v513, 0.0
    %v645 = vmax.f32 %v517, 0.0
    %v646 = vmax.f32 %v519, 0.0
    %v647 = vmax.f32 %v521, 0.0
    %v648 = vmax.f32 %v523, 0.0
    %v649 = vmax.f32 %v527, 0.0
    %v650 = vmax.f32 %v529, 0.0
    %v651 = vmax.f32 %v531, 0.0
    %v652 = vmax.f32 %v533, 0.0
    %v653 = vmax.f32 %v537, 0.0
    %v654 = vmax.f32 %v539, 0.0
    %v655 = vmax.f32 %v541, 0.0
    %v656 = vmax.f32 %v543, 0.0
    %v657 = vmax.f32 %v547, 0.0
    %v658 = vmax.f32 %v549, 0.0
    %v659 = vmax.f32 %v551, 0.0
    %v660 = vmax.f32 %v553, 0.0
    %v661 = vmax.f32 %v557, 0.0
    %v662 = vmax.f32 %v559, 0.0
    %v663 = vmax.f32 %v561, 0.0
    %v664 = vmax.f32 %v563, 0.0
    %v665 = vmax.f32 %v567, 0.0
    %v666 = vmax.f32 %v569, 0.0
    %v667 = vmax.f32 %v571, 0.0
    %v668 = vmax.f32 %v573, 0.0
    %v669 = vmax.f32 %v577, 0.0
    %v670 = vmax.f32 %v579, 0.0
    %v671 = vmax.f32 %v581, 0.0
    %v672 = vmax.f32 %v583, 0.0
    %v673 = vmax.f32 %v587, 0.0
    %v674 = vmax.f32 %v589, 0.0
    %v675 = vmax.f32 %v591, 0.0
    %v676 = vmax.f32 %v593, 0.0
    %v677 = vmax.f32 %v597, 0.0
    %v678 = vmax.f32 %v599, 0.0
    %v679 = vmax.f32 %v601, 0.0
    %v680 = vmax.f32 %v603, 0.0
    %v681 = vmax.f32 %v607, 0.0
    %v682 = vmax.f32 %v609, 0.0
    %v683 = vmax.f32 %v611, 0.0
    %v684 = vmax.f32 %v613, 0.0
    %v685 = vmax.f32 %v617, 0.0
    %v686 = vmax.f32 %v619, 0.0
    %v687 = vmax.f32 %v621, 0.0
    %v688 = vmax.f32 %v623, 0.0
    %v689 = vld [vmem:[#allocation4] sm:$0xff]
    %v690 = vld [vmem:[#allocation4 + $0x8] sm:$0x33]
    %v691 = vpack.c.bf16 %v627, %v625
    %v692 = vpack.c.bf16 %v628, %v626
    %v693 = vpack.c.bf16 %v631, %v629
    %v694 = vpack.c.bf16 %v632, %v630
    %v695 = vpack.c.bf16 %v635, %v633
    %v696 = vpack.c.bf16 %v636, %v634
    %v697 = vpack.c.bf16 %v639, %v637
    %v698 = vpack.c.bf16 %v640, %v638
    %v699 = vpack.c.bf16 %v643, %v641
    %v700 = vpack.c.bf16 %v644, %v642
    %v701 = vpack.c.bf16 %v647, %v645
    %v702 = vpack.c.bf16 %v648, %v646
    %v703 = vpack.c.bf16 %v651, %v649
    %v704 = vpack.c.bf16 %v652, %v650
    %v705 = vpack.c.bf16 %v655, %v653
    %v706 = vpack.c.bf16 %v656, %v654
    %v707 = vpack.c.bf16 %v659, %v657
    %v708 = vpack.c.bf16 %v660, %v658
    %v709 = vpack.c.bf16 %v663, %v661
    %v710 = vpack.c.bf16 %v664, %v662
    %v711 = vpack.c.bf16 %v667, %v665
    %v712 = vpack.c.bf16 %v668, %v666
    %v713 = vpack.c.bf16 %v671, %v669
    %v714 = vpack.c.bf16 %v672, %v670
    %v715 = vpack.c.bf16 %v675, %v673
    %v716 = vpack.c.bf16 %v676, %v674
    %v717 = vpack.c.bf16 %v679, %v677
    %v718 = vpack.c.bf16 %v680, %v678
    %v719 = vpack.c.bf16 %v683, %v681
    %v720 = vpack.c.bf16 %v684, %v682
    %v721 = vpack.c.bf16 %v687, %v685
    %v722 = vpack.c.bf16 %v688, %v686
    %v723 = vld [vmem:[#allocation6] sm:$0xff]
    %v724 = vld [vmem:[#allocation6 + $0x8] sm:$0xf]
    %726 = vset.pattern.permute.xlu0 0
    %727 = vperm.xlu0 %726, %v723
    %v728 = vpop.permute.xlu0 %727
    %731 = vset.pattern.permute.xlu0 0
    %732 = vperm.xlu0 %731, %v724
    %v733 = vpop.permute.xlu0 %732
    %v737 = vunpack.c.l.b16 %v689
    %v738 = vunpack.c.h.b16 %v689
    %v739 = vunpack.c.l.b16 %v690
    %v740 = vunpack.c.h.b16 %v690
    %v741 = vpack.c.b16 %v739, %v737
    %v742 = vpack.c.b16 %v740, %v738
    %745 = vmatprep.subr.bf16.mxu0 %v706
    %746 = vmatpush1.bf16.msra.mxu0 %v705
    %747 = vmatprep.subr.bf16.mxu0 %v704
    %748 = vmatpush1.bf16.msra.mxu0 %v703
    %749 = vmatprep.subr.bf16.mxu0 %v702
    %750 = vmatpush1.bf16.msra.mxu0 %v701
    %751 = vmatprep.subr.bf16.mxu0 %v700
    %752 = vmatpush1.bf16.msra.mxu0 %v699
    %753 = vmatprep.subr.bf16.mxu0 %v698
    %754 = vmatpush1.bf16.msra.mxu0 %v697
    %755 = vmatprep.subr.bf16.mxu0 %v696
    %756 = vmatpush1.bf16.msra.mxu0 %v695
    %757 = vmatprep.subr.bf16.mxu0 %v694
    %758 = vmatpush1.bf16.msra.mxu0 %v693
    %759 = vmatprep.subr.bf16.mxu0 %v692
    %760 = vmatpush1.bf16.msra.mxu0 %v691
    %761 = vmatprep.subr.bf16.mxu0 %v722
    %762 = vmatpush2.bf16.msra.mxu0 %v721
    %763 = vmatprep.subr.bf16.mxu0 %v720
    %764 = vmatpush2.bf16.msra.mxu0 %v719
    %765 = vmatprep.subr.bf16.mxu0 %v718
    %766 = vmatpush2.bf16.msra.mxu0 %v717
    %767 = vmatprep.subr.bf16.mxu0 %v716
    %768 = vmatpush2.bf16.msra.mxu0 %v715
    %769 = vmatprep.subr.bf16.mxu0 %v714
    %770 = vmatpush2.bf16.msra.mxu0 %v713
    %771 = vmatprep.subr.bf16.mxu0 %v712
    %772 = vmatpush2.bf16.msra.mxu0 %v711
    %773 = vmatprep.subr.bf16.mxu0 %v710
    %774 = vmatpush2.bf16.msra.mxu0 %v709
    %775 = vmatprep.subr.bf16.mxu0 %v708
    %776 = vmatpush2.bf16.msra.mxu0 %v707
    %777 = vmatprep.mubr.bf16.mxu0 %v742
    %778 = vmatmul.mubr.bf16.gmra.mxu0 %v741
    %v779 = vpop.f32.mrf.mxu0
    %v780 = vadd.f32 %v728, %v779
    %v781 = vpop.f32.mrf.mxu0
    %v782 = vadd.f32 %v728, %v781
    %v783 = vpop.f32.mrf.mxu0
    %v784 = vadd.f32 %v733, %v783
    %v785 = vpop.f32.mrf.mxu0
    %v786 = vadd.f32 %v733, %v785
    %787 = vdwg.mxu0
    %788 = vst [vmem:[%s5] sm:$0xff] %v780
    %789 = vst [vmem:[%s5 + $0x8] sm:$0xff] %v782
    %790 = vst [vmem:[%s5 + $0x10] sm:$0xf] %v784
    %791 = vst [vmem:[%s5 + $0x18] sm:$0xf] %v786
    // Predicated region
    $region34: #{a_call__.1} parent=1 // pred_check
      _
    $region35: #{a_call__.1} parent=1 // pred_check_branch
      %793 = sbr.rel (0) target = $region37
    $region36: #{a_call__.1} parent=1 // pred_region
      _
    $region37: #{a_call__.1} parent=1 // pred_fallthru
      _
    // Predicated region
    $region38: #{a_call__.1} parent=1 // pred_check
      _
    $region39: #{a_call__.1} parent=1 // pred_check_branch
      %795 = sbr.rel (0) target = $region41
    $region40: #{a_call__.1} parent=1 // pred_region
      _
    $region41: #{a_call__.1} parent=1 // pred_fallthru
      _
    %796 = vsyncpa [#allocation3], 1
    %797 = vsyncpa [#allocation5], 1

</llo_original>
